<compile_context>
chip_gen: v7x
topology: tpu7x:2x2x1
jax: 0.10.0
libtpu: 0.0.40
codegen_flags: <defaults>
</compile_context>

<pallas_src>
import numpy as np
import jax
import jax.numpy as jnp
from jax.experimental import pallas as pl
from jax.experimental.pallas import tpu as pltpu


def _softplus(x):
    # numerically stable log(1 + exp(x))
    return jnp.maximum(x, 0.0) + jnp.log1p(jnp.exp(-jnp.abs(x)))


def _make_lane_dense_kernel(num_channels, hw, pos_weight, chw):
    """Kernel over lane-dense (rows, num_channels*hw) tiles (hw % 128 == 0)."""

    def kernel(out_ref, tgt_ref, w_ref, res_ref):
        # ---- channel 0 (prob logits): BCEWithLogits with pos_weight --------
        # Single softplus via softplus(x) = x + softplus(-x):
        #   pw*t*sp(-x) + (1-t)*sp(x) = (pw*t + (1-t))*sp(-x) + (1-t)*x
        x0 = out_ref[:, :hw].astype(jnp.float32)
        t0 = tgt_ref[:, :hw].astype(jnp.float32)
        w0 = w_ref[:, :hw].astype(jnp.float32)
        sp = _softplus(-x0)
        one_m_t = 1.0 - t0
        bce = (pos_weight * t0 + one_m_t) * sp + one_m_t * x0
        res_ref[:, :hw] = (bce * (w0 * chw[0])).astype(res_ref.dtype)

        # ---- channels 1..C-1: MSE (pure VPU, no transcendentals) -----------
        # Static 128-aligned lane slices; per-channel weight is a compile-time
        # scalar constant (no broadcast stream from VMEM/HBM).
        for c in range(1, num_channels):
            sl = slice(c * hw, (c + 1) * hw)
            d = out_ref[:, sl].astype(jnp.float32) - tgt_ref[:, sl].astype(jnp.float32)
            res_ref[:, sl] = (
                d * d * (w_ref[:, sl].astype(jnp.float32) * chw[c])
            ).astype(res_ref.dtype)

    return kernel


def _make_channel_minor_kernel(num_channels, pos_weight, chw):
    """Fallback kernel over (tb, C, tl) tiles of the (B, C, H*W) view.

    Used when H*W is not a multiple of 128 (per-channel lane slicing of a
    fused row would force masked/XLU lane access) or when a full C*H*W row is
    too large for the per-stream VMEM budget (lanes must be tiled).
    """

    def kernel(out_ref, tgt_ref, w_ref, res_ref):
        # channel 0: BCEWithLogits (single softplus, see identity above)
        x0 = out_ref[:, 0:1, :].astype(jnp.float32)
        t0 = tgt_ref[:, 0:1, :].astype(jnp.float32)
        w0 = w_ref[:, 0:1, :].astype(jnp.float32)
        sp = _softplus(-x0)
        one_m_t = 1.0 - t0
        bce = (pos_weight * t0 + one_m_t) * sp + one_m_t * x0
        res_ref[:, 0:1, :] = (bce * (w0 * chw[0])).astype(res_ref.dtype)
        # channels 1..C-1: MSE
        for c in range(1, num_channels):
            d = (out_ref[:, c:c + 1, :].astype(jnp.float32)
                 - tgt_ref[:, c:c + 1, :].astype(jnp.float32))
            res_ref[:, c:c + 1, :] = (
                d * d * (w_ref[:, c:c + 1, :].astype(jnp.float32) * chw[c])
            ).astype(res_ref.dtype)

    return kernel


def _default_budgets():
    """Per-generation VMEM budgets: (per-stream block target, scoped limit)."""
    try:
        kind = jax.devices()[0].device_kind.lower()
    except Exception:
        kind = ""
    if "v5" in kind or "v6" in kind:
        # 128 MiB physical VMEM: larger blocks amortize per-grid-step overhead.
        return 4 << 20, 48 << 20
    # v7x (64 MiB physical VMEM) / unknown: stay conservative.
    return 2 << 20, 32 << 20


def make_unified_ppxyzb_loss(channel_weights=None, pos_weight=2.0,
                             target_block_bytes=None, vmem_limit_bytes=None):
    """Factory mirroring UnifiedPPXYZBLoss.__init__ (weights are static)."""
    if channel_weights is None:
        channel_weights = [1.5, 1.0, 1.2, 1.2, 0.8, 0.8]
    chw = tuple(float(v) for v in np.asarray(channel_weights, dtype=np.float32))
    pos_weight = float(pos_weight)

    def loss_fn(output, target, weight):
        B, C, H, W = output.shape
        assert C == len(chw)
        hw = H * W
        row = C * hw
        out_dtype = jnp.float32  # torch promotes against the f32 ch_weight buffer

        blk_bytes, vmem_limit = target_block_bytes, vmem_limit_bytes
        if blk_bytes is None or vmem_limit is None:
            d_blk, d_lim = _default_budgets()
            blk_bytes = d_blk if blk_bytes is None else blk_bytes
            vmem_limit = d_lim if vmem_limit is None else vmem_limit

        # bf16 (etc.) inputs flow through in native dtype; kernels widen to
        # f32 in-register, so narrow inputs halve HBM read traffic.
        max_itemsize = max(output.dtype.itemsize, target.dtype.itemsize,
                           weight.dtype.itemsize, jnp.dtype(out_dtype).itemsize)

        use_lane_dense = (hw % 128 == 0)
        tb = None
        if use_lane_dense:
            max_rows = blk_bytes // (row * max_itemsize)
            if max_rows >= B:
                tb = B
                # v7x has 2 TensorCores; a 1-step grid leaves one idle.  Split
                # the batch tile so the "parallel" axis has 2 (even) steps.
                if B >= 16:
                    tb = min(B, ((-(-B // 2) + 7) // 8) * 8)
            elif max_rows >= 8:
                tb = (max_rows // 8) * 8
            else:
                # Even an 8-row slab of full C*H*W rows exceeds the budget:
                # use the lane-tiled channel-minor path instead of a
                # whole-array block (which could exceed v7x's 64 MiB VMEM).
                use_lane_dense = False

        if use_lane_dense:
            # Lane-dense 2-D view (free row-major reshape).
            o2 = output.reshape(B, row)
            t2 = target.reshape(B, row)
            w2 = weight.reshape(B, row)
            grid = (pl.cdiv(B, tb),)
            # NOTE: when B % tb != 0 the trailing partial block evaluates
            # exp/softplus on padded rows; Pallas masks the out-of-bounds
            # writes, so this is benign (keep it that way if refactoring to
            # manual DMA).
            data_spec = pl.BlockSpec((tb, row), lambda i: (i, 0))
            res = pl.pallas_call(
                _make_lane_dense_kernel(C, hw, pos_weight, chw),
                out_shape=jax.ShapeDtypeStruct((B, row), out_dtype),
                grid_spec=pltpu.PrefetchScalarGridSpec(
                    num_scalar_prefetch=0,
                    grid=grid,
                    in_specs=[data_spec, data_spec, data_spec],
                    out_specs=data_spec,
                ),
                compiler_params=pltpu.CompilerParams(
                    dimension_semantics=("parallel",),
                    vmem_limit_bytes=vmem_limit,
                ),
            )(o2, t2, w2)
            return res.reshape(B, C, H, W)

        # ------- fallback: channel-minor (B, C, hw) view, lanes tiled -------
        o3 = output.reshape(B, C, hw)
        t3 = target.reshape(B, C, hw)
        w3 = weight.reshape(B, C, hw)

        # Lane tile: multiple of 128 (or the full hw), sized for ~8 batch rows.
        lane_budget = max(128, blk_bytes // (8 * C * max_itemsize))
        if hw <= lane_budget or hw < 128:
            tl = hw
        else:
            tl = max(128, (min(hw, lane_budget) // 128) * 128)
        rows_fit = max(1, blk_bytes // (C * tl * max_itemsize))
        tb = B if rows_fit >= B else min(B, max(8, (rows_fit // 8) * 8))

        grid = (pl.cdiv(B, tb), pl.cdiv(hw, tl))
        data_spec = pl.BlockSpec((tb, C, tl), lambda i, l: (i, 0, l))
        res = pl.pallas_call(
            _make_channel_minor_kernel(C, pos_weight, chw),
            out_shape=jax.ShapeDtypeStruct((B, C, hw), out_dtype),
            grid_spec=pltpu.PrefetchScalarGridSpec(
                num_scalar_prefetch=0,
                grid=grid,
                in_specs=[data_spec, data_spec, data_spec],
                out_specs=data_spec,
            ),
            compiler_params=pltpu.CompilerParams(
                dimension_semantics=("parallel", "parallel"),
                vmem_limit_bytes=vmem_limit,
            ),
        )(o3, t3, w3)
        return res.reshape(B, C, H, W)

    return loss_fn


def _reference(output, target, weight, ch_weight, pos_weight):
    """Pure-JAX reference (same math as the PyTorch module)."""
    x = output.astype(jnp.float32)
    t = target.astype(jnp.float32)
    C = output.shape[1]
    bce = pos_weight * t * _softplus(-x) + (1.0 - t) * _softplus(x)
    mse = (x - t) ** 2
    total = jnp.concatenate([bce[:, :1], mse[:, 1:]], axis=1)
    return (total * weight.astype(jnp.float32)
            * jnp.asarray(ch_weight, jnp.float32).reshape(1, C, 1, 1))


if __name__ == "__main__":
    key = jax.random.PRNGKey(0)
    ch_weight = [1.5, 1.0, 1.2, 1.2, 0.8, 0.8]
    pos_weight = 2.0
    loss_fn = make_unified_ppxyzb_loss(ch_weight, pos_weight)

    def run_case(key, B, C, H, W):
        k1, k2, k3 = jax.random.split(key, 3)
        output = jax.random.normal(k1, (B, C, H, W), dtype=jnp.float32)
        target = jax.random.uniform(k2, (B, C, H, W), dtype=jnp.float32)
        target = target.at[:, 0].set((target[:, 0] > 0.8).astype(jnp.float32))
        weight = jax.random.uniform(k3, (B, C, H, W), dtype=jnp.float32) + 0.5
        result = jax.block_until_ready(loss_fn(output, target, weight))
        ref = _reference(output, target, weight, ch_weight, pos_weight)
        assert result.shape == (B, C, H, W)
        assert result.dtype == jnp.float32
        assert jnp.allclose(result, ref, atol=1e-5, rtol=1e-5)

    k_a, k_b = jax.random.split(key)
    # Primary lane-dense path (H*W multiple of 128).
    run_case(k_a, 2, 6, 16, 16)
    # Channel-minor fallback path (H*W = 144, not a multiple of 128).
    run_case(k_b, 2, 6, 12, 12)

    print("KERNEL_OK")
</pallas_src>

<mosaic_0001>
module attributes {stable_mosaic.version = 11 : i64} {
  func.func @kernel(%arg0: i32, %arg1: memref<2x1536xf32, #tpu.memory_space<vmem>>, %arg2: memref<2x1536xf32, #tpu.memory_space<vmem>>, %arg3: memref<2x1536xf32, #tpu.memory_space<vmem>>, %arg4: memref<2x1536xf32, #tpu.memory_space<vmem>>) attributes {dimension_semantics = [#tpu.dimension_semantics<parallel>], iteration_bounds = array<i64: 1>, scalar_prefetch = 0 : i64, scratch_operands = 0 : i64, tpu.core_type = #tpu.core_type<tc>, window_params = [{transform_indices = @transform_0, window_bounds = array<i64: 2, 1536>}, {transform_indices = @transform_1, window_bounds = array<i64: 2, 1536>}, {transform_indices = @transform_2, window_bounds = array<i64: 2, 1536>}, {transform_indices = @transform_3, window_bounds = array<i64: 2, 1536>}]} {
    %c0 = arith.constant 0 : index
    %c0_0 = arith.constant 0 : index
    %0 = vector.load %arg1[%c0, %c0_0] : memref<2x1536xf32, #tpu.memory_space<vmem>>, vector<2x256xf32>
    %c0_1 = arith.constant 0 : index
    %c0_2 = arith.constant 0 : index
    %1 = vector.load %arg2[%c0_1, %c0_2] : memref<2x1536xf32, #tpu.memory_space<vmem>>, vector<2x256xf32>
    %c0_3 = arith.constant 0 : index
    %c0_4 = arith.constant 0 : index
    %2 = vector.load %arg3[%c0_3, %c0_4] : memref<2x1536xf32, #tpu.memory_space<vmem>>, vector<2x256xf32>
    %cst = arith.constant 0.000000e+00 : f32
    %3 = vector.broadcast %cst : f32 to vector<2x256xf32>
    %4 = arith.subf %3, %0 : vector<2x256xf32>
    %cst_5 = arith.constant 0.000000e+00 : f32
    %5 = vector.broadcast %cst_5 : f32 to vector<2x256xf32>
    %6 = arith.maximumf %4, %5 : vector<2x256xf32>
    %7 = math.absf %4 : vector<2x256xf32>
    %cst_6 = arith.constant 0.000000e+00 : f32
    %8 = vector.broadcast %cst_6 : f32 to vector<2x256xf32>
    %9 = arith.subf %8, %7 : vector<2x256xf32>
    %10 = math.exp %9 : vector<2x256xf32>
    %11 = math.log1p %10 : vector<2x256xf32>
    %12 = arith.addf %6, %11 : vector<2x256xf32>
    %cst_7 = arith.constant 1.000000e+00 : f32
    %13 = vector.broadcast %cst_7 : f32 to vector<2x256xf32>
    %14 = arith.subf %13, %1 : vector<2x256xf32>
    %cst_8 = arith.constant 2.000000e+00 : f32
    %15 = vector.broadcast %cst_8 : f32 to vector<2x256xf32>
    %16 = arith.mulf %15, %1 : vector<2x256xf32>
    %17 = arith.addf %16, %14 : vector<2x256xf32>
    %18 = arith.mulf %17, %12 : vector<2x256xf32>
    %19 = arith.mulf %14, %0 : vector<2x256xf32>
    %20 = arith.addf %18, %19 : vector<2x256xf32>
    %cst_9 = arith.constant 1.500000e+00 : f32
    %21 = vector.broadcast %cst_9 : f32 to vector<2x256xf32>
    %22 = arith.mulf %2, %21 : vector<2x256xf32>
    %23 = arith.mulf %20, %22 : vector<2x256xf32>
    %c0_10 = arith.constant 0 : index
    %c0_11 = arith.constant 0 : index
    %24 = vector.load %arg4[%c0_10, %c0_11] : memref<2x1536xf32, #tpu.memory_space<vmem>>, vector<2x256xf32>
    tpu.vector_store %arg4[%c0_10, %c0_11], %23 {strides = array<i32>} : memref<2x1536xf32, #tpu.memory_space<vmem>>, vector<2x256xf32>,
    %c0_12 = arith.constant 0 : index
    %c256 = arith.constant 256 : index
    %25 = vector.load %arg1[%c0_12, %c256] : memref<2x1536xf32, #tpu.memory_space<vmem>>, vector<2x256xf32>
    %c0_13 = arith.constant 0 : index
    %c256_14 = arith.constant 256 : index
    %26 = vector.load %arg2[%c0_13, %c256_14] : memref<2x1536xf32, #tpu.memory_space<vmem>>, vector<2x256xf32>
    %27 = arith.subf %25, %26 : vector<2x256xf32>
    %28 = arith.mulf %27, %27 : vector<2x256xf32>
    %c0_15 = arith.constant 0 : index
    %c256_16 = arith.constant 256 : index
    %29 = vector.load %arg3[%c0_15, %c256_16] : memref<2x1536xf32, #tpu.memory_space<vmem>>, vector<2x256xf32>
    %cst_17 = arith.constant 1.000000e+00 : f32
    %30 = vector.broadcast %cst_17 : f32 to vector<2x256xf32>
    %31 = arith.mulf %29, %30 : vector<2x256xf32>
    %32 = arith.mulf %28, %31 : vector<2x256xf32>
    %c0_18 = arith.constant 0 : index
    %c256_19 = arith.constant 256 : index
    %33 = vector.load %arg4[%c0_18, %c256_19] : memref<2x1536xf32, #tpu.memory_space<vmem>>, vector<2x256xf32>
    tpu.vector_store %arg4[%c0_18, %c256_19], %32 {strides = array<i32>} : memref<2x1536xf32, #tpu.memory_space<vmem>>, vector<2x256xf32>,
    %c0_20 = arith.constant 0 : index
    %c512 = arith.constant 512 : index
    %34 = vector.load %arg1[%c0_20, %c512] : memref<2x1536xf32, #tpu.memory_space<vmem>>, vector<2x256xf32>
    %c0_21 = arith.constant 0 : index
    %c512_22 = arith.constant 512 : index
    %35 = vector.load %arg2[%c0_21, %c512_22] : memref<2x1536xf32, #tpu.memory_space<vmem>>, vector<2x256xf32>
    %36 = arith.subf %34, %35 : vector<2x256xf32>
    %37 = arith.mulf %36, %36 : vector<2x256xf32>
    %c0_23 = arith.constant 0 : index
    %c512_24 = arith.constant 512 : index
    %38 = vector.load %arg3[%c0_23, %c512_24] : memref<2x1536xf32, #tpu.memory_space<vmem>>, vector<2x256xf32>
    %cst_25 = arith.constant 1.200000e+00 : f32
    %39 = vector.broadcast %cst_25 : f32 to vector<2x256xf32>
    %40 = arith.mulf %38, %39 : vector<2x256xf32>
    %41 = arith.mulf %37, %40 : vector<2x256xf32>
    %c0_26 = arith.constant 0 : index
    %c512_27 = arith.constant 512 : index
    %42 = vector.load %arg4[%c0_26, %c512_27] : memref<2x1536xf32, #tpu.memory_space<vmem>>, vector<2x256xf32>
    tpu.vector_store %arg4[%c0_26, %c512_27], %41 {strides = array<i32>} : memref<2x1536xf32, #tpu.memory_space<vmem>>, vector<2x256xf32>,
    %c0_28 = arith.constant 0 : index
    %c768 = arith.constant 768 : index
    %43 = vector.load %arg1[%c0_28, %c768] : memref<2x1536xf32, #tpu.memory_space<vmem>>, vector<2x256xf32>
    %c0_29 = arith.constant 0 : index
    %c768_30 = arith.constant 768 : index
    %44 = vector.load %arg2[%c0_29, %c768_30] : memref<2x1536xf32, #tpu.memory_space<vmem>>, vector<2x256xf32>
    %45 = arith.subf %43, %44 : vector<2x256xf32>
    %46 = arith.mulf %45, %45 : vector<2x256xf32>
    %c0_31 = arith.constant 0 : index
    %c768_32 = arith.constant 768 : index
    %47 = vector.load %arg3[%c0_31, %c768_32] : memref<2x1536xf32, #tpu.memory_space<vmem>>, vector<2x256xf32>
    %cst_33 = arith.constant 1.200000e+00 : f32
    %48 = vector.broadcast %cst_33 : f32 to vector<2x256xf32>
    %49 = arith.mulf %47, %48 : vector<2x256xf32>
    %50 = arith.mulf %46, %49 : vector<2x256xf32>
    %c0_34 = arith.constant 0 : index
    %c768_35 = arith.constant 768 : index
    %51 = vector.load %arg4[%c0_34, %c768_35] : memref<2x1536xf32, #tpu.memory_space<vmem>>, vector<2x256xf32>
    tpu.vector_store %arg4[%c0_34, %c768_35], %50 {strides = array<i32>} : memref<2x1536xf32, #tpu.memory_space<vmem>>, vector<2x256xf32>,
    %c0_36 = arith.constant 0 : index
    %c1024 = arith.constant 1024 : index
    %52 = vector.load %arg1[%c0_36, %c1024] : memref<2x1536xf32, #tpu.memory_space<vmem>>, vector<2x256xf32>
    %c0_37 = arith.constant 0 : index
    %c1024_38 = arith.constant 1024 : index
    %53 = vector.load %arg2[%c0_37, %c1024_38] : memref<2x1536xf32, #tpu.memory_space<vmem>>, vector<2x256xf32>
    %54 = arith.subf %52, %53 : vector<2x256xf32>
    %55 = arith.mulf %54, %54 : vector<2x256xf32>
    %c0_39 = arith.constant 0 : index
    %c1024_40 = arith.constant 1024 : index
    %56 = vector.load %arg3[%c0_39, %c1024_40] : memref<2x1536xf32, #tpu.memory_space<vmem>>, vector<2x256xf32>
    %cst_41 = arith.constant 8.000000e-01 : f32
    %57 = vector.broadcast %cst_41 : f32 to vector<2x256xf32>
    %58 = arith.mulf %56, %57 : vector<2x256xf32>
    %59 = arith.mulf %55, %58 : vector<2x256xf32>
    %c0_42 = arith.constant 0 : index
    %c1024_43 = arith.constant 1024 : index
    %60 = vector.load %arg4[%c0_42, %c1024_43] : memref<2x1536xf32, #tpu.memory_space<vmem>>, vector<2x256xf32>
    tpu.vector_store %arg4[%c0_42, %c1024_43], %59 {strides = array<i32>} : memref<2x1536xf32, #tpu.memory_space<vmem>>, vector<2x256xf32>,
    %c0_44 = arith.constant 0 : index
    %c1280 = arith.constant 1280 : index
    %61 = vector.load %arg1[%c0_44, %c1280] : memref<2x1536xf32, #tpu.memory_space<vmem>>, vector<2x256xf32>
    %c0_45 = arith.constant 0 : index
    %c1280_46 = arith.constant 1280 : index
    %62 = vector.load %arg2[%c0_45, %c1280_46] : memref<2x1536xf32, #tpu.memory_space<vmem>>, vector<2x256xf32>
    %63 = arith.subf %61, %62 : vector<2x256xf32>
    %64 = arith.mulf %63, %63 : vector<2x256xf32>
    %c0_47 = arith.constant 0 : index
    %c1280_48 = arith.constant 1280 : index
    %65 = vector.load %arg3[%c0_47, %c1280_48] : memref<2x1536xf32, #tpu.memory_space<vmem>>, vector<2x256xf32>
    %cst_49 = arith.constant 8.000000e-01 : f32
    %66 = vector.broadcast %cst_49 : f32 to vector<2x256xf32>
    %67 = arith.mulf %65, %66 : vector<2x256xf32>
    %68 = arith.mulf %64, %67 : vector<2x256xf32>
    %c0_50 = arith.constant 0 : index
    %c1280_51 = arith.constant 1280 : index
    %69 = vector.load %arg4[%c0_50, %c1280_51] : memref<2x1536xf32, #tpu.memory_space<vmem>>, vector<2x256xf32>
    tpu.vector_store %arg4[%c0_50, %c1280_51], %68 {strides = array<i32>} : memref<2x1536xf32, #tpu.memory_space<vmem>>, vector<2x256xf32>,
    return
  }
  func.func @transform_0(%arg0: i32) -> (i32, i32) {
    %c0_i32 = arith.constant 0 : i32
    %c0_i32_0 = arith.constant 0 : i32
    return %arg0, %c0_i32 : i32, i32
  }
  func.func @transform_1(%arg0: i32) -> (i32, i32) {
    %c0_i32 = arith.constant 0 : i32
    %c0_i32_0 = arith.constant 0 : i32
    return %arg0, %c0_i32 : i32, i32
  }
  func.func @transform_2(%arg0: i32) -> (i32, i32) {
    %c0_i32 = arith.constant 0 : i32
    %c0_i32_0 = arith.constant 0 : i32
    return %arg0, %c0_i32 : i32, i32
  }
  func.func @transform_3(%arg0: i32) -> (i32, i32) {
    %c0_i32 = arith.constant 0 : i32
    %c0_i32_0 = arith.constant 0 : i32
    return %arg0, %c0_i32 : i32, i32
  }
}

</mosaic_0001>

<llo_original>
// kernel: tpu_custom_call.1
$region0: #{tpu_custom_call.1}
  #allocation0 [shape = 'u32[]', space=smem, size = 0x4, offset = 0x4, fixed_abs, tag = 'smem constant byte address 0x4 - core index']
  #allocation1 [shape = 'u32[144,128]{1,0:T(1,128)}', space=vmem, size = 0x12000, scoped, tag = 'internal scratch']
  %s0 = inlined_call_operand.hbm [shape: f32[2,1536], index: 0, kind: input, shape index: {}]
  %s1 = inlined_call_operand.hbm [shape: f32[2,1536], index: 1, kind: input, shape index: {}]
  %s2 = inlined_call_operand.hbm [shape: f32[2,1536], index: 2, kind: input, shape index: {}]
  %s3 = inlined_call_operand.hbm [shape: f32[2,1536], index: 3, kind: output, shape index: {}]
  %s4 = sld [smem:[#allocation0]]
  $region34: #{tpu_custom_call.1} parent=0
    _
  %s6 = ssub.s32 1, %s4
  %s7 = scalar_select 0, %s6, %s4
  $region1: #{tpu_custom_call.1} parent=0
    #allocation2 [shape = 'u8[12288]{0}', space=vmem, size = 0x3000, scoped, tag = 'input window, operand 0, single buffered']
    #allocation3 [shape = 's32[1]{0}', space=sflag, size = 0x4, scoped, tag = 'scoped memory for tpu_custom_call.1']
    #allocation4 [shape = 's32[1]{0}', space=sflag, size = 0x4, scoped, tag = 'scoped memory for tpu_custom_call.1']
    #allocation5 [shape = 'u8[12288]{0}', space=vmem, size = 0x3000, scoped, tag = 'input window, operand 1, single buffered']
    #allocation6 [shape = 's32[1]{0}', space=sflag, size = 0x4, scoped, tag = 'scoped memory for tpu_custom_call.1']
    #allocation7 [shape = 'u8[12288]{0}', space=vmem, size = 0x3000, scoped, tag = 'input window, operand 2, single buffered']
    #allocation8 [shape = 'u8[12288]{0}', space=vmem, size = 0x3000, scoped, tag = 'output window, operand 0, single buffered']
    %8 = vsyncpa [#allocation3], 0
    %9 = vsyncpa [#allocation6], 0
    %10 = vsyncpa [#allocation4], 0
    // Predicated region
    $region2: #{tpu_custom_call.1} parent=1 // pred_check
      _
    $region3: #{tpu_custom_call.1} parent=1 // pred_check_branch
      %12 = sbr.rel (0) target = $region5
    $region4: #{tpu_custom_call.1} parent=1 // pred_region
      %s14 = ssub.s32 384, 384
      %15 = vsyncadd [#allocation3], %s14
      %s17 = sshll.u32 [#allocation2], 4
      %s18 = int_to_ptr.vmem [resolvable:$true] %s17
      %20 = dma.hbm_to_vmem [thread:$0]  %s0, 384, %s18, [#allocation3]
    $region5: #{tpu_custom_call.1} parent=1 // pred_fallthru
      _
    // Predicated region
    $region6: #{tpu_custom_call.1} parent=1 // pred_check
      _
    $region7: #{tpu_custom_call.1} parent=1 // pred_check_branch
      %22 = sbr.rel (0) target = $region9
    $region8: #{tpu_custom_call.1} parent=1 // pred_region
      %s24 = ssub.s32 384, 384
      %25 = vsyncadd [#allocation6], %s24
      %s27 = sshll.u32 [#allocation5], 4
      %s28 = int_to_ptr.vmem [resolvable:$true] %s27
      %30 = dma.hbm_to_vmem [thread:$0]  %s1, 384, %s28, [#allocation6]
    $region9: #{tpu_custom_call.1} parent=1 // pred_fallthru
      _
    // Predicated region
    $region10: #{tpu_custom_call.1} parent=1 // pred_check
      _
    $region11: #{tpu_custom_call.1} parent=1 // pred_check_branch
      %32 = sbr.rel (0) target = $region13
    $region12: #{tpu_custom_call.1} parent=1 // pred_region
      %s34 = ssub.s32 384, 384
      %35 = vsyncadd [#allocation6], %s34
      %s37 = sshll.u32 [#allocation7], 4
      %s38 = int_to_ptr.vmem [resolvable:$true] %s37
      %40 = dma.hbm_to_vmem [thread:$0]  %s2, 384, %s38, [#allocation6]
    $region13: #{tpu_custom_call.1} parent=1 // pred_fallthru
      _
    // Predicated region
    $region14: #{tpu_custom_call.1} parent=1 // pred_check
      _
    $region15: #{tpu_custom_call.1} parent=1 // pred_check_branch
      %42 = sbr.rel (0) target = $region17
    $region16: #{tpu_custom_call.1} parent=1 // pred_region
      %43 = dma.done [#allocation3], 384
    $region17: #{tpu_custom_call.1} parent=1 // pred_fallthru
      _
    // Predicated region
    $region18: #{tpu_custom_call.1} parent=1 // pred_check
      _
    $region19: #{tpu_custom_call.1} parent=1 // pred_check_branch
      %45 = sbr.rel (0) target = $region21
    $region20: #{tpu_custom_call.1} parent=1 // pred_region
      %46 = dma.done [#allocation6], 384
    $region21: #{tpu_custom_call.1} parent=1 // pred_fallthru
      _
    // Predicated region
    $region22: #{tpu_custom_call.1} parent=1 // pred_check
      _
    $region23: #{tpu_custom_call.1} parent=1 // pred_check_branch
      %48 = sbr.rel (0) target = $region25
    $region24: #{tpu_custom_call.1} parent=1 // pred_region
      %49 = dma.done [#allocation6], 384
    $region25: #{tpu_custom_call.1} parent=1 // pred_fallthru
      _
    %v50 = vld [vmem:[#allocation2] sm:$0xf]
    %v51 = vld [vmem:[#allocation5] sm:$0xf]
    %v52 = vld [vmem:[#allocation7] sm:$0xf]
    %v53 = vsub.f32 0.0, %v50
    %v54 = vmax.f32 %v53, 0.0
    %v55 = vand.u32 2147483647, %v53
    %v56 = vsub.f32 0.0, %v55
    %v57 = vmul.f32 %v56, 1.442695
    %v58 = vpow.pop %v57
    %v59 = vadd.f32 %v58, 1.0
    %v60 = vlog2.pop %v59
    %v61 = vmul.f32 %v60, 0.6931472
    %v62 = vmul.f32 -0.5, %v58
    %v63 = vadd.f32 %v62, 1.0
    %v64 = vmul.f32 %v63, %v58
    %v65 = vand.u32 2147483647, %v58
    %vm66 = vcmp.lt.f32.partialorder %v65, 0.0004427343
    %v67 = vsel %vm66, %v64, %v61
    %v68 = vadd.f32 %v54, %v67
    %v69 = vsub.f32 1.0, %v51
    %v70 = vmul.f32 %v51, 2.0
    %v71 = vadd.f32 %v70, %v69
    %v72 = vmul.f32 %v71, %v68
    %v73 = vmul.f32 %v69, %v50
    %v74 = vadd.f32 %v72, %v73
    %v75 = vmul.f32 %v52, 1.5
    %v76 = vmul.f32 %v74, %v75
    %77 = vst [vmem:[#allocation8] sm:$0xf] %v76
    %v78 = vld [vmem:[#allocation2 + $0x4] sm:$0xf]
    %v79 = vld [vmem:[#allocation5 + $0x4] sm:$0xf]
    %v80 = vsub.f32 %v78, %v79
    %v81 = vmul.f32 %v80, %v80
    %v82 = vld [vmem:[#allocation7 + $0x4] sm:$0xf]
    %v83 = vmul.f32 %v81, %v82
    %84 = vst [vmem:[#allocation8 + $0x4] sm:$0xf] %v83
    %v85 = vld [vmem:[#allocation2 + $0x8] sm:$0xf]
    %v86 = vld [vmem:[#allocation5 + $0x8] sm:$0xf]
    %v87 = vsub.f32 %v85, %v86
    %v88 = vmul.f32 %v87, %v87
    %v89 = vld [vmem:[#allocation7 + $0x8] sm:$0xf]
    %v90 = vmul.f32 %v89, 1.2
    %v91 = vmul.f32 %v88, %v90
    %92 = vst [vmem:[#allocation8 + $0x8] sm:$0xf] %v91
    %v93 = vld [vmem:[#allocation2 + $0xc] sm:$0xf]
    %v94 = vld [vmem:[#allocation5 + $0xc] sm:$0xf]
    %v95 = vsub.f32 %v93, %v94
    %v96 = vmul.f32 %v95, %v95
    %v97 = vld [vmem:[#allocation7 + $0xc] sm:$0xf]
    %v98 = vmul.f32 %v97, 1.2
    %v99 = vmul.f32 %v96, %v98
    %100 = vst [vmem:[#allocation8 + $0xc] sm:$0xf] %v99
    %v101 = vld [vmem:[#allocation2 + $0x10] sm:$0xf]
    %v102 = vld [vmem:[#allocation5 + $0x10] sm:$0xf]
    %v103 = vsub.f32 %v101, %v102
    %v104 = vmul.f32 %v103, %v103
    %v105 = vld [vmem:[#allocation7 + $0x10] sm:$0xf]
    %v106 = vmul.f32 %v105, 0.8
    %v107 = vmul.f32 %v104, %v106
    %108 = vst [vmem:[#allocation8 + $0x10] sm:$0xf] %v107
    %v109 = vld [vmem:[#allocation2 + $0x14] sm:$0xf]
    %v110 = vld [vmem:[#allocation5 + $0x14] sm:$0xf]
    %v111 = vsub.f32 %v109, %v110
    %v112 = vmul.f32 %v111, %v111
    %v113 = vld [vmem:[#allocation7 + $0x14] sm:$0xf]
    %v114 = vmul.f32 %v113, 0.8
    %v115 = vmul.f32 %v112, %v114
    %116 = vst [vmem:[#allocation8 + $0x14] sm:$0xf] %v115
    // Predicated region
    $region26: #{tpu_custom_call.1} parent=1 // pred_check
      _
    $region27: #{tpu_custom_call.1} parent=1 // pred_check_branch
      %118 = sbr.rel (0) target = $region29
    $region28: #{tpu_custom_call.1} parent=1 // pred_region
      %s120 = ssub.s32 384, 384
      %121 = vsyncadd [#allocation4], %s120
      %s123 = sshll.u32 [#allocation8], 4
      %s124 = int_to_ptr.vmem [resolvable:$true] %s123
      %126 = dma.vmem_to_hbm [thread:$0]  %s124, 384, %s3, [#allocation4]
    $region29: #{tpu_custom_call.1} parent=1 // pred_fallthru
      _
    // Predicated region
    $region30: #{tpu_custom_call.1} parent=1 // pred_check
      _
    $region31: #{tpu_custom_call.1} parent=1 // pred_check_branch
      %128 = sbr.rel (0) target = $region33
    $region32: #{tpu_custom_call.1} parent=1 // pred_region
      %129 = dma.done [#allocation4], 384
    $region33: #{tpu_custom_call.1} parent=1 // pred_fallthru
      _
    %130 = vsyncpa [#allocation3], 1
    %131 = vsyncpa [#allocation6], 1
    %132 = vsyncpa [#allocation4], 1

</llo_original>
